<compile_context>
chip_gen: v7x
topology: tpu7x:2x2x1
jax: 0.10.0
libtpu: 0.0.40
codegen_flags: <defaults>
</compile_context>

<pallas_src>
import jax
import jax.numpy as jnp
from jax.experimental import pallas as pl
from jax.experimental.pallas import tpu as pltpu


def _make_hinge_kernel(NP):
    def _hinge_loss_kernel(col_ref, row_ref, out_ref):
        # col_ref: (NP, 2) f32 in VMEM
        #   lane 0 : 1 - probs   (i-side, column form)
        #   lane 1 : targets     (i-side, column form, padded -inf)
        # row_ref: (2, NP) f32 in VMEM
        #   sublane 0 : probs    (j-side, row form)
        #   sublane 1 : targets  (j-side, row form, padded +inf)
        # out_ref: (1, 1) f32 in SMEM
        c_i = col_ref[:, 0:1]        # (NP, 1)  sublane-resident, holds 1 - p_i
        t_i = col_ref[:, 1:2]        # (NP, 1)
        p_j = row_ref[0:1, :]        # (1, NP)  lane-resident
        t_j = row_ref[1:2, :]        # (1, NP)

        # Implicit (NP,1) x (1,NP) broadcasts -> (NP, NP); pure VPU work.
        hinge = jnp.maximum(c_i + p_j, 0.0)
        # Padded pairs automatically excluded: t_i padded with -inf, t_j with
        # +inf, so the strict comparison is False for any padded index.
        mask = t_i > t_j
        out_ref[0, 0] = jnp.sum(jnp.where(mask, hinge, 0.0))

    return _hinge_loss_kernel


def hinge_loss_1_pallas(probs, targets, sample=100):
    """Pallas TPU implementation of hinge_loss_1.forward (deterministic path)."""
    n = probs.shape[0]
    assert n <= sample, "deterministic path requires N <= sample"

    # Pad the pairwise extent to a full (8,128)-aligned square.
    NP = max(128, int(pl.cdiv(n, 128)) * 128)
    pad = NP - n

    p = probs.astype(jnp.float32)
    t = targets.astype(jnp.float32)

    # i-side (column form): fold the "+1" constant into the packed column.
    c_col = jnp.pad(1.0 - p, (0, pad))                          # finite pad (masked)
    t_col = jnp.pad(t, (0, pad), constant_values=-jnp.inf)      # i-side padding
    # j-side (row form)
    p_row = jnp.pad(p, (0, pad))                                # finite pad (masked)
    t_row = jnp.pad(t, (0, pad), constant_values=jnp.inf)       # j-side padding

    col = jnp.stack([c_col, t_col], axis=1)                     # (NP, 2)
    row = jnp.stack([p_row, t_row], axis=0)                     # (2, NP)

    in_bytes = (col.size + row.size) * 4
    cost = pl.CostEstimate(
        flops=5 * NP * NP,            # add, max, cmp, select, sum (advisory)
        transcendentals=0,
        bytes_accessed=in_bytes + 4,
    )

    out = pl.pallas_call(
        _make_hinge_kernel(NP),
        out_shape=jax.ShapeDtypeStruct((1, 1), jnp.float32),
        in_specs=[
            pl.BlockSpec(memory_space=pltpu.MemorySpace.VMEM),
            pl.BlockSpec(memory_space=pltpu.MemorySpace.VMEM),
        ],
        out_specs=pl.BlockSpec(memory_space=pltpu.MemorySpace.SMEM),
        cost_estimate=cost,
    )(col, row)
    return out[0, 0]


def _reference(probs, targets):
    pi = probs[:, None]
    pj = probs[None, :]
    ti = targets[:, None]
    tj = targets[None, :]
    hinge = jnp.maximum(1.0 - pi + pj, 0.0)
    return jnp.sum(jnp.where(ti > tj, hinge, 0.0))


if __name__ == "__main__":
    key = jax.random.PRNGKey(0)

    # Small case (N=8) -- exercises the padding/masking path (pad = 120).
    kp, kt = jax.random.split(key)
    N = 8
    probs = jax.random.uniform(kp, (N,), dtype=jnp.float32)
    targets = jax.random.randint(kt, (N,), 0, 3).astype(jnp.float32)
    loss = jax.block_until_ready(hinge_loss_1_pallas(probs, targets, sample=100))
    ref = _reference(probs, targets)
    assert jnp.allclose(loss, ref, rtol=1e-5, atol=1e-5), (loss, ref)

    # Full-size case (N = sample = 100).
    kp2, kt2 = jax.random.split(kp)
    N2 = 100
    probs2 = jax.random.uniform(kp2, (N2,), dtype=jnp.float32)
    targets2 = jax.random.randint(kt2, (N2,), 0, 3).astype(jnp.float32)
    loss2 = jax.block_until_ready(hinge_loss_1_pallas(probs2, targets2, sample=100))
    ref2 = _reference(probs2, targets2)
    # Reduction order differs from the row-major reference sum -> 1e-4 atol.
    assert jnp.allclose(loss2, ref2, rtol=1e-5, atol=1e-4), (loss2, ref2)

    print("KERNEL_OK")
</pallas_src>

<mosaic_0001>
module attributes {stable_mosaic.version = 11 : i64} {
  func.func @_hinge_loss_kernel(%arg0: memref<128x2xf32, #tpu.memory_space<vmem>>, %arg1: memref<2x128xf32, #tpu.memory_space<vmem>>, %arg2: memref<1x1xf32, #tpu.memory_space<smem>>) attributes {dimension_semantics = [], scalar_prefetch = 0 : i64, scratch_operands = 0 : i64, tpu.core_type = #tpu.core_type<tc>} {
    %c0 = arith.constant 0 : index
    %c0_0 = arith.constant 0 : index
    %0 = vector.load %arg0[%c0, %c0_0] : memref<128x2xf32, #tpu.memory_space<vmem>>, vector<128x1xf32>
    %c0_1 = arith.constant 0 : index
    %c1 = arith.constant 1 : index
    %1 = vector.load %arg0[%c0_1, %c1] : memref<128x2xf32, #tpu.memory_space<vmem>>, vector<128x1xf32>
    %c0_2 = arith.constant 0 : index
    %c0_3 = arith.constant 0 : index
    %2 = vector.load %arg1[%c0_2, %c0_3] : memref<2x128xf32, #tpu.memory_space<vmem>>, vector<1x128xf32>
    %c1_4 = arith.constant 1 : index
    %c0_5 = arith.constant 0 : index
    %3 = vector.load %arg1[%c1_4, %c0_5] : memref<2x128xf32, #tpu.memory_space<vmem>>, vector<1x128xf32>
    %4 = vector.broadcast %0 : vector<128x1xf32> to vector<128x128xf32>
    %5 = vector.broadcast %2 : vector<1x128xf32> to vector<128x128xf32>
    %6 = arith.addf %4, %5 : vector<128x128xf32>
    %cst = arith.constant 0.000000e+00 : f32
    %7 = vector.broadcast %cst : f32 to vector<128x128xf32>
    %8 = arith.maximumf %6, %7 : vector<128x128xf32>
    %9 = vector.broadcast %1 : vector<128x1xf32> to vector<128x128xf32>
    %10 = vector.broadcast %3 : vector<1x128xf32> to vector<128x128xf32>
    %11 = arith.cmpf ogt, %9, %10 : vector<128x128xf32>
    %cst_6 = arith.constant 0.000000e+00 : f32
    %12 = vector.broadcast %cst_6 : f32 to vector<128x128xf32>
    %13 = arith.select %11, %8, %12 : vector<128x128xi1>, vector<128x128xf32>
    %14 = vector.shape_cast %13 : vector<128x128xf32> to vector<1x128x128xf32>
    %cst_7 = arith.constant dense<0.000000e+00> : vector<1xf32>
    %15 = vector.multi_reduction <add>, %14, %cst_7 [1, 2] : vector<1x128x128xf32> to vector<1xf32>
    %16 = vector.shape_cast %15 : vector<1xf32> to vector<1x1x1xf32>
    %17 = vector.extract %16[0, 0, 0] : f32 from vector<1x1x1xf32>
    %c0_8 = arith.constant 0 : index
    %c0_9 = arith.constant 0 : index
    %18 = memref.load %arg2[%c0_8, %c0_9] : memref<1x1xf32, #tpu.memory_space<smem>>
    memref.store %17, %arg2[%c0_8, %c0_9] : memref<1x1xf32, #tpu.memory_space<smem>>
    return
  }
}

</mosaic_0001>

<llo_original>
// kernel: tpu_custom_call.1
$region0: #{tpu_custom_call.1}
  #allocation0 [shape = 'u32[]', space=smem, size = 0x4, offset = 0x4, fixed_abs, tag = 'smem constant byte address 0x4 - core index']
  #allocation1 [shape = 'u32[144,128]{1,0:T(1,128)}', space=vmem, size = 0x12000, scoped, tag = 'internal scratch']
  %s0 = inlined_call_operand.vmem [shape: f32[128,2], index: 0, kind: input, shape index: {}]
  %s1 = inlined_call_operand.vmem [shape: f32[2,128], index: 1, kind: input, shape index: {}]
  %s2 = inlined_call_operand.hbm [shape: f32[1,1], index: 2, kind: output, shape index: {}]
  %s3 = sld [smem:[#allocation0]]
  $region18: #{tpu_custom_call.1} parent=0
    _
  %s5 = ssub.s32 1, %s3
  %s6 = scalar_select 0, %s5, %s3
  $region1: #{tpu_custom_call.1} parent=0
    #allocation2 [shape = 'u8[512]{0}', space=smem, size = 0x200, scoped, tag = 'output window, operand 0, single buffered']
    #allocation3 [shape = 's32[1]{0}', space=sflag, size = 0x4, scoped, tag = 'scoped memory for tpu_custom_call.1']
    %7 = vsyncpa [#allocation3], 0
    // Predicated region
    $region2: #{tpu_custom_call.1} parent=1 // pred_check
      _
    $region3: #{tpu_custom_call.1} parent=1 // pred_check_branch
      %9 = sbr.rel (0) target = $region5
    $region4: #{tpu_custom_call.1} parent=1 // pred_region
      _
    $region5: #{tpu_custom_call.1} parent=1 // pred_fallthru
      _
    // Predicated region
    $region6: #{tpu_custom_call.1} parent=1 // pred_check
      _
    $region7: #{tpu_custom_call.1} parent=1 // pred_check_branch
      %11 = sbr.rel (0) target = $region9
    $region8: #{tpu_custom_call.1} parent=1 // pred_region
      _
    $region9: #{tpu_custom_call.1} parent=1 // pred_fallthru
      _
    %v12 = vld [vmem:[%s0] sm:$0xff]
    %v13 = vld [vmem:[%s0 + $0x8] sm:$0xff]
    %v14 = vld [vmem:[%s0 + $0x10] sm:$0xff]
    %v15 = vld [vmem:[%s0 + $0x18] sm:$0xff]
    %v16 = vld [vmem:[%s0 + $0x20] sm:$0xff]
    %v17 = vld [vmem:[%s0 + $0x28] sm:$0xff]
    %v18 = vld [vmem:[%s0 + $0x30] sm:$0xff]
    %v19 = vld [vmem:[%s0 + $0x38] sm:$0xff]
    %v20 = vld [vmem:[%s0 + $0x40] sm:$0xff]
    %v21 = vld [vmem:[%s0 + $0x48] sm:$0xff]
    %v22 = vld [vmem:[%s0 + $0x50] sm:$0xff]
    %v23 = vld [vmem:[%s0 + $0x58] sm:$0xff]
    %v24 = vld [vmem:[%s0 + $0x60] sm:$0xff]
    %v25 = vld [vmem:[%s0 + $0x68] sm:$0xff]
    %v26 = vld [vmem:[%s0 + $0x70] sm:$0xff]
    %v27 = vld [vmem:[%s0 + $0x78] sm:$0xff]
    %v28 = vld [vmem:[%s1] sm:$0x1]
    %v29 = vld [vmem:[%s1 + $0x1] sm:$0x1]
    %31 = vset.pattern.permute.xlu0 0
    %32 = vperm.xlu0 %31, %v12
    %v33 = vpop.permute.xlu0 %32
    %36 = vset.pattern.permute.xlu0 0
    %37 = vperm.xlu0 %36, %v13
    %v38 = vpop.permute.xlu0 %37
    %41 = vset.pattern.permute.xlu0 0
    %42 = vperm.xlu0 %41, %v14
    %v43 = vpop.permute.xlu0 %42
    %46 = vset.pattern.permute.xlu0 0
    %47 = vperm.xlu0 %46, %v15
    %v48 = vpop.permute.xlu0 %47
    %51 = vset.pattern.permute.xlu0 0
    %52 = vperm.xlu0 %51, %v16
    %v53 = vpop.permute.xlu0 %52
    %56 = vset.pattern.permute.xlu0 0
    %57 = vperm.xlu0 %56, %v17
    %v58 = vpop.permute.xlu0 %57
    %61 = vset.pattern.permute.xlu0 0
    %62 = vperm.xlu0 %61, %v18
    %v63 = vpop.permute.xlu0 %62
    %66 = vset.pattern.permute.xlu0 0
    %67 = vperm.xlu0 %66, %v19
    %v68 = vpop.permute.xlu0 %67
    %71 = vset.pattern.permute.xlu0 0
    %72 = vperm.xlu0 %71, %v20
    %v73 = vpop.permute.xlu0 %72
    %76 = vset.pattern.permute.xlu0 0
    %77 = vperm.xlu0 %76, %v21
    %v78 = vpop.permute.xlu0 %77
    %81 = vset.pattern.permute.xlu0 0
    %82 = vperm.xlu0 %81, %v22
    %v83 = vpop.permute.xlu0 %82
    %86 = vset.pattern.permute.xlu0 0
    %87 = vperm.xlu0 %86, %v23
    %v88 = vpop.permute.xlu0 %87
    %91 = vset.pattern.permute.xlu0 0
    %92 = vperm.xlu0 %91, %v24
    %v93 = vpop.permute.xlu0 %92
    %96 = vset.pattern.permute.xlu0 0
    %97 = vperm.xlu0 %96, %v25
    %v98 = vpop.permute.xlu0 %97
    %101 = vset.pattern.permute.xlu0 0
    %102 = vperm.xlu0 %101, %v26
    %v103 = vpop.permute.xlu0 %102
    %106 = vset.pattern.permute.xlu0 0
    %107 = vperm.xlu0 %106, %v27
    %v108 = vpop.permute.xlu0 %107
    %v110 = vlaneseq
    %v111 = vshrl.u32 %v110, 7
    %v112 = vsub.s32 0, %v111
    %v113 = vrot.slane %v28, %v112
    %v114 = vadd.f32 %v33, %v113
    %v115 = vadd.f32 %v38, %v113
    %v116 = vadd.f32 %v43, %v113
    %v117 = vadd.f32 %v48, %v113
    %v118 = vadd.f32 %v53, %v113
    %v119 = vadd.f32 %v58, %v113
    %v120 = vadd.f32 %v63, %v113
    %v121 = vadd.f32 %v68, %v113
    %v122 = vadd.f32 %v73, %v113
    %v123 = vadd.f32 %v78, %v113
    %v124 = vadd.f32 %v83, %v113
    %v125 = vadd.f32 %v88, %v113
    %v126 = vadd.f32 %v93, %v113
    %v127 = vadd.f32 %v98, %v113
    %v128 = vadd.f32 %v103, %v113
    %v129 = vadd.f32 %v108, %v113
    %v130 = vmax.f32 %v114, 0.0
    %v131 = vmax.f32 %v115, 0.0
    %v132 = vmax.f32 %v116, 0.0
    %v133 = vmax.f32 %v117, 0.0
    %v134 = vmax.f32 %v118, 0.0
    %v135 = vmax.f32 %v119, 0.0
    %v136 = vmax.f32 %v120, 0.0
    %v137 = vmax.f32 %v121, 0.0
    %v138 = vmax.f32 %v122, 0.0
    %v139 = vmax.f32 %v123, 0.0
    %v140 = vmax.f32 %v124, 0.0
    %v141 = vmax.f32 %v125, 0.0
    %v142 = vmax.f32 %v126, 0.0
    %v143 = vmax.f32 %v127, 0.0
    %v144 = vmax.f32 %v128, 0.0
    %v145 = vmax.f32 %v129, 0.0
    %146 = vset.pattern.permute.xlu0 1
    %147 = vperm.xlu0 %146, %v12
    %v148 = vpop.permute.xlu0 %147
    %150 = vset.pattern.permute.xlu0 1
    %151 = vperm.xlu0 %150, %v13
    %v152 = vpop.permute.xlu0 %151
    %154 = vset.pattern.permute.xlu0 1
    %155 = vperm.xlu0 %154, %v14
    %v156 = vpop.permute.xlu0 %155
    %158 = vset.pattern.permute.xlu0 1
    %159 = vperm.xlu0 %158, %v15
    %v160 = vpop.permute.xlu0 %159
    %162 = vset.pattern.permute.xlu0 1
    %163 = vperm.xlu0 %162, %v16
    %v164 = vpop.permute.xlu0 %163
    %166 = vset.pattern.permute.xlu0 1
    %167 = vperm.xlu0 %166, %v17
    %v168 = vpop.permute.xlu0 %167
    %170 = vset.pattern.permute.xlu0 1
    %171 = vperm.xlu0 %170, %v18
    %v172 = vpop.permute.xlu0 %171
    %174 = vset.pattern.permute.xlu0 1
    %175 = vperm.xlu0 %174, %v19
    %v176 = vpop.permute.xlu0 %175
    %178 = vset.pattern.permute.xlu0 1
    %179 = vperm.xlu0 %178, %v20
    %v180 = vpop.permute.xlu0 %179
    %182 = vset.pattern.permute.xlu0 1
    %183 = vperm.xlu0 %182, %v21
    %v184 = vpop.permute.xlu0 %183
    %186 = vset.pattern.permute.xlu0 1
    %187 = vperm.xlu0 %186, %v22
    %v188 = vpop.permute.xlu0 %187
    %190 = vset.pattern.permute.xlu0 1
    %191 = vperm.xlu0 %190, %v23
    %v192 = vpop.permute.xlu0 %191
    %194 = vset.pattern.permute.xlu0 1
    %195 = vperm.xlu0 %194, %v24
    %v196 = vpop.permute.xlu0 %195
    %198 = vset.pattern.permute.xlu0 1
    %199 = vperm.xlu0 %198, %v25
    %v200 = vpop.permute.xlu0 %199
    %202 = vset.pattern.permute.xlu0 1
    %203 = vperm.xlu0 %202, %v26
    %v204 = vpop.permute.xlu0 %203
    %206 = vset.pattern.permute.xlu0 1
    %207 = vperm.xlu0 %206, %v27
    %v208 = vpop.permute.xlu0 %207
    %v210 = vlaneseq
    %v211 = vshrl.u32 %v210, 7
    %v212 = vsub.s32 0, %v211
    %v213 = vrot.slane %v29, %v212
    %vm214 = vcmp.gt.f32.partialorder %v148, %v213
    %vm215 = vcmp.gt.f32.partialorder %v152, %v213
    %vm216 = vcmp.gt.f32.partialorder %v156, %v213
    %vm217 = vcmp.gt.f32.partialorder %v160, %v213
    %vm218 = vcmp.gt.f32.partialorder %v164, %v213
    %vm219 = vcmp.gt.f32.partialorder %v168, %v213
    %vm220 = vcmp.gt.f32.partialorder %v172, %v213
    %vm221 = vcmp.gt.f32.partialorder %v176, %v213
    %vm222 = vcmp.gt.f32.partialorder %v180, %v213
    %vm223 = vcmp.gt.f32.partialorder %v184, %v213
    %vm224 = vcmp.gt.f32.partialorder %v188, %v213
    %vm225 = vcmp.gt.f32.partialorder %v192, %v213
    %vm226 = vcmp.gt.f32.partialorder %v196, %v213
    %vm227 = vcmp.gt.f32.partialorder %v200, %v213
    %vm228 = vcmp.gt.f32.partialorder %v204, %v213
    %vm229 = vcmp.gt.f32.partialorder %v208, %v213
    %v230 = vsel %vm214, %v130, 0.0
    %v231 = vsel %vm215, %v131, 0.0
    %v232 = vsel %vm216, %v132, 0.0
    %v233 = vsel %vm217, %v133, 0.0
    %v234 = vsel %vm218, %v134, 0.0
    %v235 = vsel %vm219, %v135, 0.0
    %v236 = vsel %vm220, %v136, 0.0
    %v237 = vsel %vm221, %v137, 0.0
    %v238 = vsel %vm222, %v138, 0.0
    %v239 = vsel %vm223, %v139, 0.0
    %v240 = vsel %vm224, %v140, 0.0
    %v241 = vsel %vm225, %v141, 0.0
    %v242 = vsel %vm226, %v142, 0.0
    %v243 = vsel %vm227, %v143, 0.0
    %v244 = vsel %vm228, %v144, 0.0
    %v245 = vsel %vm229, %v145, 0.0
    %v246 = vadd.f32 %v230, %v231
    %v247 = vadd.f32 %v246, %v232
    %v248 = vadd.f32 %v247, %v233
    %v249 = vadd.f32 %v248, %v234
    %v250 = vadd.f32 %v249, %v235
    %v251 = vadd.f32 %v250, %v236
    %v252 = vadd.f32 %v251, %v237
    %v253 = vadd.f32 %v252, %v238
    %v254 = vadd.f32 %v253, %v239
    %v255 = vadd.f32 %v254, %v240
    %v256 = vadd.f32 %v255, %v241
    %v257 = vadd.f32 %v256, %v242
    %v258 = vadd.f32 %v257, %v243
    %v259 = vadd.f32 %v258, %v244
    %v260 = vadd.f32 %v259, %v245
    %261 = vadd.xlane.f32.xlu0 %v260
    %v262 = vpop.xlane.xlu0 %261
    %v263 = vrot.slane %v262, 4
    %v264 = vadd.f32 %v262, %v263
    %v265 = vrot.slane %v264, 2
    %v266 = vadd.f32 %v264, %v265
    %v267 = vrot.slane %v266, 1
    %v268 = vadd.f32 %v266, %v267
    %s269 = vtos %v268
    %s270 = scalar_lea.smem [#allocation2], 0
    %271 = sst [smem:[%s270]] %s269
    // Predicated region
    $region10: #{tpu_custom_call.1} parent=1 // pred_check
      _
    $region11: #{tpu_custom_call.1} parent=1 // pred_check_branch
      %273 = sbr.rel (0) target = $region13
    $region12: #{tpu_custom_call.1} parent=1 // pred_region
      %s275 = ssub.s32 16, 16
      %276 = vsyncadd [#allocation3], %s275
      %279 = dma.smem_to_hbm [#allocation2], 16, %s2, [#allocation3]
    $region13: #{tpu_custom_call.1} parent=1 // pred_fallthru
      _
    // Predicated region
    $region14: #{tpu_custom_call.1} parent=1 // pred_check
      _
    $region15: #{tpu_custom_call.1} parent=1 // pred_check_branch
      %281 = sbr.rel (0) target = $region17
    $region16: #{tpu_custom_call.1} parent=1 // pred_region
      %282 = dma.done [#allocation3], 16
    $region17: #{tpu_custom_call.1} parent=1 // pred_fallthru
      _
    %283 = sfence
    %284 = vsyncpa [#allocation3], 1

</llo_original>
